<compile_context>
chip_gen: v7x
topology: tpu7x:2x2x1
jax: 0.10.0
libtpu: 0.0.40
codegen_flags: <defaults>
</compile_context>

<pallas_src>
import functools

import jax
import jax.numpy as jnp
from jax.experimental import pallas as pl
from jax.experimental.pallas import tpu as pltpu

_EPS = 1e-12            # torch.nn.functional.normalize default eps
_EPS2 = _EPS * _EPS     # equivalent clamp applied to the squared norm


def _round_up(x, n):
    return (x + n - 1) // n * n


def _vmem_capacity_bytes():
    try:
        return int(pltpu.get_tpu_info().vmem_capacity_bytes)
    except Exception:
        return 64 << 20          # conservative fallback (v7x-sized)


def _normalize_rows(x, scale=1.0):
    """f32 row-normalize: x / max(||x||, eps), optionally folding a scale."""
    x = x.astype(jnp.float32)
    ss = jnp.sum(x * x, axis=-1, keepdims=True)
    return x * (jax.lax.rsqrt(jnp.maximum(ss, _EPS2)) * scale)


# ---------------------------------------------------------------------------
# Kernels
# ---------------------------------------------------------------------------
def _cache_normalized_weights(w_ref, wn_ref):
    """Normalize the resident (tc, F) bf16 weight tile once per class tile.

    Safe only while the batch axis (grid axis 1) is inner + sequential.
    """
    @pl.when(pl.program_id(1) == 0)
    def _():
        w = w_ref[...].astype(jnp.float32)
        ss = jnp.sum(w * w, axis=-1, keepdims=True)
        wn_ref[...] = (w * jax.lax.rsqrt(jnp.maximum(ss, _EPS2))).astype(wn_ref.dtype)


def _cosine_logits(f_ref, wn_ref):
    """(tb, tc) = f @ wn^T without a transpose; f is already normalized bf16."""
    return jax.lax.dot_general(
        f_ref[...], wn_ref[...],
        dimension_numbers=(((1,), (1,)), ((), ())),
        preferred_element_type=jnp.float32)


def _cosface_margin_kernel(t_ref, f_ref, w_ref, o_ref, wn_ref, *, s, m):
    _cache_normalized_weights(w_ref, wn_ref)
    logits = _cosine_logits(f_ref, wn_ref)                    # already * s (folded)
    tb, tc = logits.shape
    col0 = pl.program_id(0) * tc                               # global class offset
    class_ids = col0 + jax.lax.broadcasted_iota(jnp.int32, (tb, tc), 1)
    tgt = t_ref[...]                                           # (tb, 1) int32
    out = jnp.where(class_ids == tgt, logits - (s * m), logits)
    o_ref[...] = out.astype(o_ref.dtype)


def _cosface_plain_kernel(f_ref, w_ref, o_ref, wn_ref):
    _cache_normalized_weights(w_ref, wn_ref)
    o_ref[...] = _cosine_logits(f_ref, wn_ref).astype(o_ref.dtype)


# ---------------------------------------------------------------------------
# Wrapper
# ---------------------------------------------------------------------------
def cosface_forward(features, weight, targets=None, *, s=30.0, m=0.35,
                    tb=1024, tc=1024, out_dtype=jnp.float32):
    """CosFace forward. features: (B,F), weight: (C,F), targets: (B,) int or None."""
    B, F = features.shape
    C, F2 = weight.shape
    assert F == F2

    out_bytes = jnp.dtype(out_dtype).itemsize

    # --- tile selection against a generation-aware VMEM budget ---------------
    tb_eff = min(tb, _round_up(B, 8))          # sublane multiple
    tc_eff = min(tc, _round_up(C, 128))        # lane-dense output stores

    vmem_cap = _vmem_capacity_bytes()
    budget = int(0.75 * vmem_cap)              # headroom for Mosaic scratch/spill

    def vmem_need(tb_, tc_):
        return (2 * tb_ * F * 2                # bf16 feature double buffer
                + 2 * tc_ * F * 2              # bf16 weight double buffer
                + tc_ * F * 2                  # normalized-weight scratch
                + 2 * tb_ * tc_ * out_bytes    # output double buffer
                + 2 * tb_ * 4                  # targets double buffer
                + (2 << 20))                   # slack

    while vmem_need(tb_eff, tc_eff) > budget:
        if tc_eff > 256:
            tc_eff = max(256, _round_up(tc_eff // 2, 128))
        elif tb_eff > 256:
            tb_eff = max(256, _round_up(tb_eff // 2, 8))
        else:
            break

    B_pad = _round_up(B, tb_eff)
    C_pad = _round_up(C, tc_eff)
    n_c = C_pad // tc_eff
    n_b = B_pad // tb_eff
    grid = (n_c, n_b)                          # class axis OUTER, batch inner

    # --- wrapper-side prep: normalize features once, bf16 streams ------------
    # Fold `s` into the feature normalization (free: fused into the same mul)
    # only when the margin path is taken.
    feat_scale = float(s) if targets is not None else 1.0
    f_p = _normalize_rows(features, feat_scale).astype(jnp.bfloat16)
    if B_pad != B:
        f_p = jnp.pad(f_p, ((0, B_pad - B), (0, 0)))

    # Weight: single cast+pad pass to bf16 (the parameter could also be kept
    # pre-padded/cast across steps outside this function).
    w_p = weight.astype(jnp.bfloat16)
    if C_pad != C:
        w_p = jnp.pad(w_p, ((0, C_pad - C), (0, 0)))

    compiler_params = pltpu.CompilerParams(
        # INVARIANT: batch axis must remain inner + "arbitrary" (wn cache guard).
        dimension_semantics=("parallel", "arbitrary"),
        vmem_limit_bytes=max(32 << 20, min(budget, vmem_cap)))

    # Feature block index is constant across the grid when n_b == 1 -> one DMA.
    feat_passes = 1 if n_b == 1 else n_c
    cost = pl.CostEstimate(
        flops=2 * B_pad * C_pad * F,
        transcendentals=C_pad,                              # weight-row rsqrt
        bytes_accessed=(B_pad * F * 2 * feat_passes         # bf16 features
                        + C_pad * F * 2                     # bf16 weights
                        + B_pad * C_pad * out_bytes         # logits
                        + (B_pad * 4 if targets is not None else 0)))

    out_shape = jax.ShapeDtypeStruct((B_pad, C_pad), out_dtype)
    f_spec = pl.BlockSpec((tb_eff, F), lambda c, b: (b, 0))
    w_spec = pl.BlockSpec((tc_eff, F), lambda c, b: (c, 0))
    o_spec = pl.BlockSpec((tb_eff, tc_eff), lambda c, b: (b, c))
    scratch = [pltpu.VMEM((tc_eff, F), jnp.bfloat16)]       # cached normalized W tile

    if targets is None:
        out = pl.pallas_call(
            _cosface_plain_kernel,
            out_shape=out_shape,
            grid_spec=pltpu.PrefetchScalarGridSpec(
                num_scalar_prefetch=0, grid=grid,
                in_specs=[f_spec, w_spec], out_specs=o_spec,
                scratch_shapes=scratch),
            compiler_params=compiler_params,
            cost_estimate=cost,
        )(f_p, w_p)
    else:
        tgt2d = targets.astype(jnp.int32).reshape(B, 1)
        if B_pad != B:
            tgt2d = jnp.pad(tgt2d, ((0, B_pad - B), (0, 0)), constant_values=-1)
        t_spec = pl.BlockSpec((tb_eff, 1), lambda c, b: (b, 0))
        out = pl.pallas_call(
            functools.partial(_cosface_margin_kernel, s=float(s), m=float(m)),
            out_shape=out_shape,
            grid_spec=pltpu.PrefetchScalarGridSpec(
                num_scalar_prefetch=0, grid=grid,
                in_specs=[t_spec, f_spec, w_spec], out_specs=o_spec,
                scratch_shapes=scratch),
            compiler_params=compiler_params,
            cost_estimate=cost,
        )(tgt2d, f_p, w_p)

    return out[:B, :C]


# ---------------------------------------------------------------------------
# Reference + self-test
# ---------------------------------------------------------------------------
def _reference(features, weight, targets, s, m):
    fn = features / jnp.maximum(
        jnp.linalg.norm(features, axis=1, keepdims=True), _EPS)
    wn = weight / jnp.maximum(
        jnp.linalg.norm(weight, axis=1, keepdims=True), _EPS)
    logits = fn @ wn.T
    if targets is None:
        return logits
    one_hot = jax.nn.one_hot(targets, weight.shape[0], dtype=logits.dtype)
    return (logits * (1 - one_hot) + (logits - m) * one_hot) * s


if __name__ == "__main__":
    key = jax.random.PRNGKey(0)
    k_feat, k_w, k_tgt = jax.random.split(key, 3)

    batch, in_features, out_features = 8, 32, 16
    s, m = 30.0, 0.35

    features = jax.random.normal(k_feat, (batch, in_features), dtype=jnp.float32)
    # Xavier-uniform init for Weight (out_features, in_features), deterministic.
    bound = float(jnp.sqrt(6.0 / (in_features + out_features)))
    weight = jax.random.uniform(
        k_w, (out_features, in_features), dtype=jnp.float32,
        minval=-bound, maxval=bound)
    targets = jax.random.randint(k_tgt, (batch,), 0, out_features, dtype=jnp.int32)

    # With targets (margin + scale path). bf16 MXU operands trade ~1e-3 cosine
    # precision (x30 after scaling) for throughput; accumulation stays f32.
    out = jax.block_until_ready(cosface_forward(features, weight, targets, s=s, m=m))
    ref = _reference(features, weight, targets, s, m)
    assert out.shape == ref.shape
    assert jnp.allclose(out, ref, atol=2e-1, rtol=2e-2), (
        "margin path mismatch, max abs err = "
        f"{float(jnp.max(jnp.abs(out - ref)))}")

    # Without targets (plain cosine logits, unscaled).
    out2 = jax.block_until_ready(cosface_forward(features, weight, None))
    ref2 = _reference(features, weight, None, s, m)
    assert jnp.allclose(out2, ref2, atol=2e-2, rtol=2e-2), (
        "logits path mismatch, max abs err = "
        f"{float(jnp.max(jnp.abs(out2 - ref2)))}")

    print("KERNEL_OK")
</pallas_src>

<mosaic_0001>
module attributes {stable_mosaic.version = 11 : i64} {
  func.func @_cosface_margin_kernel(%arg0: i32, %arg1: i32, %arg2: memref<8x1xi32, #tpu.memory_space<vmem>>, %arg3: memref<8x32xbf16, #tpu.memory_space<vmem>>, %arg4: memref<128x32xbf16, #tpu.memory_space<vmem>>, %arg5: memref<8x128xf32, #tpu.memory_space<vmem>>, %arg6: memref<128x32xbf16, #tpu.memory_space<vmem>>) attributes {dimension_semantics = [#tpu.dimension_semantics<parallel>, #tpu.dimension_semantics<arbitrary>], iteration_bounds = array<i64: 1, 1>, scalar_prefetch = 0 : i64, scratch_operands = 1 : i64, tpu.core_type = #tpu.core_type<tc>, window_params = [{transform_indices = @transform_0, window_bounds = array<i64: 8, 1>}, {transform_indices = @transform_1, window_bounds = array<i64: 8, 32>}, {transform_indices = @transform_2, window_bounds = array<i64: 128, 32>}, {transform_indices = @transform_3, window_bounds = array<i64: 8, 128>}]} {
    %c0_i32 = arith.constant 0 : i32
    %0 = arith.cmpi eq, %arg1, %c0_i32 : i32
    %1 = arith.extui %0 : i1 to i32
    %c0_i32_0 = arith.constant 0 : i32
    %2 = arith.cmpi ne, %1, %c0_i32_0 : i32
    scf.if %2 {
      %c0_9 = arith.constant 0 : index
      %c0_10 = arith.constant 0 : index
      %17 = vector.load %arg4[%c0_9, %c0_10] : memref<128x32xbf16, #tpu.memory_space<vmem>>, vector<128x32xbf16>
      %18 = arith.extf %17 : vector<128x32xbf16> to vector<128x32xf32>
      %19 = arith.mulf %18, %18 : vector<128x32xf32>
      %cst_11 = arith.constant dense<0.000000e+00> : vector<128xf32>
      %20 = vector.multi_reduction <add>, %19, %cst_11 [1] : vector<128x32xf32> to vector<128xf32>
      %21 = vector.shape_cast %20 : vector<128xf32> to vector<128x1xf32>
      %cst_12 = arith.constant 1.000000e-24 : f32
      %22 = vector.broadcast %cst_12 : f32 to vector<128x1xf32>
      %23 = arith.maximumf %21, %22 : vector<128x1xf32>
      %24 = math.rsqrt %23 : vector<128x1xf32>
      %25 = vector.broadcast %24 : vector<128x1xf32> to vector<128x32xf32>
      %26 = arith.mulf %18, %25 : vector<128x32xf32>
      %27 = arith.truncf %26 : vector<128x32xf32> to vector<128x32xbf16>
      %c0_13 = arith.constant 0 : index
      %c0_14 = arith.constant 0 : index
      %28 = vector.load %arg6[%c0_13, %c0_14] : memref<128x32xbf16, #tpu.memory_space<vmem>>, vector<128x32xbf16>
      tpu.vector_store %arg6[%c0_13, %c0_14], %27 {strides = array<i32>} : memref<128x32xbf16, #tpu.memory_space<vmem>>, vector<128x32xbf16>,
    } else {
    }
    %c0 = arith.constant 0 : index
    %c0_1 = arith.constant 0 : index
    %3 = vector.load %arg3[%c0, %c0_1] : memref<8x32xbf16, #tpu.memory_space<vmem>>, vector<8x32xbf16>
    %c0_2 = arith.constant 0 : index
    %c0_3 = arith.constant 0 : index
    %4 = vector.load %arg6[%c0_2, %c0_3] : memref<128x32xbf16, #tpu.memory_space<vmem>>, vector<128x32xbf16>
    %cst = arith.constant dense<0.000000e+00> : vector<8x128xf32>
    %5 = tpu.matmul %3, %4, %cst {dimension_numbers = #tpu.dot_dimension_numbers<[1], [1], [0], [0], [0, 0, 1, 0], [], []>} : vector<8x32xbf16>, vector<128x32xbf16>, vector<8x128xf32> -> vector<8x128xf32>
    %c128_i32 = arith.constant 128 : i32
    %6 = arith.muli %arg0, %c128_i32 : i32
    %7 = tpu.iota {dimensions = array<i32: 1>} : vector<8x128xi32>
    %8 = vector.broadcast %6 : i32 to vector<8x128xi32>
    %9 = arith.addi %8, %7 : vector<8x128xi32>
    %c0_4 = arith.constant 0 : index
    %c0_5 = arith.constant 0 : index
    %10 = vector.load %arg2[%c0_4, %c0_5] : memref<8x1xi32, #tpu.memory_space<vmem>>, vector<8x1xi32>
    %11 = vector.broadcast %10 : vector<8x1xi32> to vector<8x128xi32>
    %12 = arith.cmpi eq, %9, %11 : vector<8x128xi32>
    %cst_6 = arith.constant 1.050000e+01 : f32
    %13 = vector.broadcast %cst_6 : f32 to vector<8x128xf32>
    %14 = arith.subf %5, %13 : vector<8x128xf32>
    %15 = arith.select %12, %14, %5 : vector<8x128xi1>, vector<8x128xf32>
    %c0_7 = arith.constant 0 : index
    %c0_8 = arith.constant 0 : index
    %16 = vector.load %arg5[%c0_7, %c0_8] : memref<8x128xf32, #tpu.memory_space<vmem>>, vector<8x128xf32>
    tpu.vector_store %arg5[%c0_7, %c0_8], %15 {strides = array<i32>} : memref<8x128xf32, #tpu.memory_space<vmem>>, vector<8x128xf32>,
    return
  }
  func.func @transform_0(%arg0: i32, %arg1: i32) -> (i32, i32) {
    %c0_i32 = arith.constant 0 : i32
    %c0_i32_0 = arith.constant 0 : i32
    return %arg1, %c0_i32 : i32, i32
  }
  func.func @transform_1(%arg0: i32, %arg1: i32) -> (i32, i32) {
    %c0_i32 = arith.constant 0 : i32
    %c0_i32_0 = arith.constant 0 : i32
    return %arg1, %c0_i32 : i32, i32
  }
  func.func @transform_2(%arg0: i32, %arg1: i32) -> (i32, i32) {
    %c0_i32 = arith.constant 0 : i32
    %c0_i32_0 = arith.constant 0 : i32
    return %arg0, %c0_i32 : i32, i32
  }
  func.func @transform_3(%arg0: i32, %arg1: i32) -> (i32, i32) {
    %c0_i32 = arith.constant 0 : i32
    return %arg1, %arg0 : i32, i32
  }
}

</mosaic_0001>

<llo_original>
// kernel: tpu_custom_call.1
$region0: #{tpu_custom_call.1}
  #allocation0 [shape = 'u32[]', space=smem, size = 0x4, offset = 0x4, fixed_abs, tag = 'smem constant byte address 0x4 - core index']
  #allocation1 [shape = 'u32[144,128]{1,0:T(1,128)}', space=vmem, size = 0x12000, scoped, tag = 'internal scratch']
  #allocation2 [shape = 'bf16[128,32]{1,0:T(16,128)(2,1)}', space=vmem, size = 0x8000, scoped, tag = 'scratch operand']
  %s0 = inlined_call_operand.vmem [shape: s32[8,1], index: 0, kind: input, shape index: {}]
  %s1 = inlined_call_operand.vmem [shape: bf16[8,32], index: 1, kind: input, shape index: {}]
  %s2 = inlined_call_operand.vmem [shape: bf16[128,32], index: 2, kind: input, shape index: {}]
  %s3 = inlined_call_operand.hbm [shape: f32[8,128], index: 3, kind: output, shape index: {}]
  %s4 = sld [smem:[#allocation0]]
  $region26: #{tpu_custom_call.1} parent=0
    _
  %s6 = ssub.s32 1, %s4
  %s7 = scalar_select 0, %s6, %s4
  $region1: #{tpu_custom_call.1} parent=0
    #allocation3 [shape = 'u8[4096]{0}', space=vmem, size = 0x1000, scoped, tag = 'output window, operand 0, single buffered']
    #allocation4 [shape = 's32[1]{0}', space=sflag, size = 0x4, scoped, tag = 'scoped memory for tpu_custom_call.1']
    %8 = vsyncpa [#allocation4], 0
    // Predicated region
    $region2: #{tpu_custom_call.1} parent=1 // pred_check
      _
    $region3: #{tpu_custom_call.1} parent=1 // pred_check_branch
      %10 = sbr.rel (0) target = $region5
    $region4: #{tpu_custom_call.1} parent=1 // pred_region
      _
    $region5: #{tpu_custom_call.1} parent=1 // pred_fallthru
      _
    // Predicated region
    $region6: #{tpu_custom_call.1} parent=1 // pred_check
      _
    $region7: #{tpu_custom_call.1} parent=1 // pred_check_branch
      %12 = sbr.rel (0) target = $region9
    $region8: #{tpu_custom_call.1} parent=1 // pred_region
      _
    $region9: #{tpu_custom_call.1} parent=1 // pred_fallthru
      _
    // Predicated region
    $region10: #{tpu_custom_call.1} parent=1 // pred_check
      _
    $region11: #{tpu_custom_call.1} parent=1 // pred_check_branch
      %14 = sbr.rel (0) target = $region13
    $region12: #{tpu_custom_call.1} parent=1 // pred_region
      _
    $region13: #{tpu_custom_call.1} parent=1 // pred_fallthru
      _
    %p16 = scmp.eq.s32.totalorder 0, 0
    // Predicated region
    $region14: #{tpu_custom_call.1} parent=1 // pred_check
      %p17 = pneg %p16
    $region15: #{tpu_custom_call.1} parent=1 // pred_check_branch
      %19 = sbr.rel (%p17) target = $region17
    $region16: #{tpu_custom_call.1} parent=1 // pred_region
      %v20 = vld [vmem:[%s2] sm:$0xf]
      %v21 = vld [vmem:[%s2 + $0x4] sm:$0xf]
      %v22 = vld [vmem:[%s2 + $0x8] sm:$0xf]
      %v23 = vld [vmem:[%s2 + $0xc] sm:$0xf]
      %v24 = vld [vmem:[%s2 + $0x10] sm:$0xf]
      %v25 = vld [vmem:[%s2 + $0x14] sm:$0xf]
      %v26 = vld [vmem:[%s2 + $0x18] sm:$0xf]
      %v27 = vld [vmem:[%s2 + $0x1c] sm:$0xf]
      %v28 = vld [vmem:[%s2 + $0x20] sm:$0xf]
      %v29 = vld [vmem:[%s2 + $0x24] sm:$0xf]
      %v30 = vld [vmem:[%s2 + $0x28] sm:$0xf]
      %v31 = vld [vmem:[%s2 + $0x2c] sm:$0xf]
      %v32 = vld [vmem:[%s2 + $0x30] sm:$0xf]
      %v33 = vld [vmem:[%s2 + $0x34] sm:$0xf]
      %v34 = vld [vmem:[%s2 + $0x38] sm:$0xf]
      %v35 = vld [vmem:[%s2 + $0x3c] sm:$0xf]
      %v36 = vunpack.c.l.bf16 %v20
      %v37 = vunpack.c.l.bf16 %v21
      %v38 = vunpack.c.l.bf16 %v22
      %v39 = vunpack.c.l.bf16 %v23
      %v40 = vunpack.c.l.bf16 %v24
      %v41 = vunpack.c.l.bf16 %v25
      %v42 = vunpack.c.l.bf16 %v26
      %v43 = vunpack.c.l.bf16 %v27
      %v44 = vunpack.c.l.bf16 %v28
      %v45 = vunpack.c.l.bf16 %v29
      %v46 = vunpack.c.l.bf16 %v30
      %v47 = vunpack.c.l.bf16 %v31
      %v48 = vunpack.c.l.bf16 %v32
      %v49 = vunpack.c.l.bf16 %v33
      %v50 = vunpack.c.l.bf16 %v34
      %v51 = vunpack.c.l.bf16 %v35
      %v52 = vmul.f32 %v36, %v36
      %v53 = vmul.f32 %v37, %v37
      %v54 = vmul.f32 %v38, %v38
      %v55 = vmul.f32 %v39, %v39
      %v56 = vmul.f32 %v40, %v40
      %v57 = vmul.f32 %v41, %v41
      %v58 = vmul.f32 %v42, %v42
      %v59 = vmul.f32 %v43, %v43
      %v60 = vmul.f32 %v44, %v44
      %v61 = vmul.f32 %v45, %v45
      %v62 = vmul.f32 %v46, %v46
      %v63 = vmul.f32 %v47, %v47
      %v64 = vmul.f32 %v48, %v48
      %v65 = vmul.f32 %v49, %v49
      %v66 = vmul.f32 %v50, %v50
      %v67 = vmul.f32 %v51, %v51
      %vm68 = vcmask 261120
      %v69 = vsel %vm68, %v52, 0.0
      %70 = vadd.xlane.f32.xlu0 %v69
      %v71 = vpop.xlane.xlu0 %70
      %v72 = vsel %vm68, %v53, 0.0
      %73 = vadd.xlane.f32.xlu0 %v72
      %v74 = vpop.xlane.xlu0 %73
      %v75 = vsel %vm68, %v54, 0.0
      %76 = vadd.xlane.f32.xlu0 %v75
      %v77 = vpop.xlane.xlu0 %76
      %v78 = vsel %vm68, %v55, 0.0
      %79 = vadd.xlane.f32.xlu0 %v78
      %v80 = vpop.xlane.xlu0 %79
      %v81 = vsel %vm68, %v56, 0.0
      %82 = vadd.xlane.f32.xlu0 %v81
      %v83 = vpop.xlane.xlu0 %82
      %v84 = vsel %vm68, %v57, 0.0
      %85 = vadd.xlane.f32.xlu0 %v84
      %v86 = vpop.xlane.xlu0 %85
      %v87 = vsel %vm68, %v58, 0.0
      %88 = vadd.xlane.f32.xlu0 %v87
      %v89 = vpop.xlane.xlu0 %88
      %v90 = vsel %vm68, %v59, 0.0
      %91 = vadd.xlane.f32.xlu0 %v90
      %v92 = vpop.xlane.xlu0 %91
      %v93 = vsel %vm68, %v60, 0.0
      %94 = vadd.xlane.f32.xlu0 %v93
      %v95 = vpop.xlane.xlu0 %94
      %v96 = vsel %vm68, %v61, 0.0
      %97 = vadd.xlane.f32.xlu0 %v96
      %v98 = vpop.xlane.xlu0 %97
      %v99 = vsel %vm68, %v62, 0.0
      %100 = vadd.xlane.f32.xlu0 %v99
      %v101 = vpop.xlane.xlu0 %100
      %v102 = vsel %vm68, %v63, 0.0
      %103 = vadd.xlane.f32.xlu0 %v102
      %v104 = vpop.xlane.xlu0 %103
      %v105 = vsel %vm68, %v64, 0.0
      %106 = vadd.xlane.f32.xlu0 %v105
      %v107 = vpop.xlane.xlu0 %106
      %v108 = vsel %vm68, %v65, 0.0
      %109 = vadd.xlane.f32.xlu0 %v108
      %v110 = vpop.xlane.xlu0 %109
      %v111 = vsel %vm68, %v66, 0.0
      %112 = vadd.xlane.f32.xlu0 %v111
      %v113 = vpop.xlane.xlu0 %112
      %v114 = vsel %vm68, %v67, 0.0
      %115 = vadd.xlane.f32.xlu0 %v114
      %v116 = vpop.xlane.xlu0 %115
      %v117 = vmax.f32 %v71, 1e-24
      %v118 = vmax.f32 %v74, 1e-24
      %v119 = vmax.f32 %v77, 1e-24
      %v120 = vmax.f32 %v80, 1e-24
      %v121 = vmax.f32 %v83, 1e-24
      %v122 = vmax.f32 %v86, 1e-24
      %v123 = vmax.f32 %v89, 1e-24
      %v124 = vmax.f32 %v92, 1e-24
      %v125 = vmax.f32 %v95, 1e-24
      %v126 = vmax.f32 %v98, 1e-24
      %v127 = vmax.f32 %v101, 1e-24
      %v128 = vmax.f32 %v104, 1e-24
      %v129 = vmax.f32 %v107, 1e-24
      %v130 = vmax.f32 %v110, 1e-24
      %v131 = vmax.f32 %v113, 1e-24
      %v132 = vmax.f32 %v116, 1e-24
      %v133 = vrsqrt.pop %v117
      %v134 = vrsqrt.pop %v118
      %v135 = vrsqrt.pop %v119
      %v136 = vrsqrt.pop %v120
      %v137 = vrsqrt.pop %v121
      %v138 = vrsqrt.pop %v122
      %v139 = vrsqrt.pop %v123
      %v140 = vrsqrt.pop %v124
      %v141 = vrsqrt.pop %v125
      %v142 = vrsqrt.pop %v126
      %v143 = vrsqrt.pop %v127
      %v144 = vrsqrt.pop %v128
      %v145 = vrsqrt.pop %v129
      %v146 = vrsqrt.pop %v130
      %v147 = vrsqrt.pop %v131
      %v148 = vrsqrt.pop %v132
      %v149 = vmul.f32 %v36, %v133
      %v150 = vmul.f32 %v37, %v134
      %v151 = vmul.f32 %v38, %v135
      %v152 = vmul.f32 %v39, %v136
      %v153 = vmul.f32 %v40, %v137
      %v154 = vmul.f32 %v41, %v138
      %v155 = vmul.f32 %v42, %v139
      %v156 = vmul.f32 %v43, %v140
      %v157 = vmul.f32 %v44, %v141
      %v158 = vmul.f32 %v45, %v142
      %v159 = vmul.f32 %v46, %v143
      %v160 = vmul.f32 %v47, %v144
      %v161 = vmul.f32 %v48, %v145
      %v162 = vmul.f32 %v49, %v146
      %v163 = vmul.f32 %v50, %v147
      %v164 = vmul.f32 %v51, %v148
      %v165 = vpack.c.bf16 %v150, %v149
      %v166 = vpack.c.bf16 %v152, %v151
      %v167 = vpack.c.bf16 %v154, %v153
      %v168 = vpack.c.bf16 %v156, %v155
      %v169 = vpack.c.bf16 %v158, %v157
      %v170 = vpack.c.bf16 %v160, %v159
      %v171 = vpack.c.bf16 %v162, %v161
      %v172 = vpack.c.bf16 %v164, %v163
      %173 = vst.msk [vmem:[#allocation2] sm:$0xff] %vm68, %v165
      %174 = vst.msk [vmem:[#allocation2 + $0x8] sm:$0xff] %vm68, %v166
      %175 = vst.msk [vmem:[#allocation2 + $0x10] sm:$0xff] %vm68, %v167
      %176 = vst.msk [vmem:[#allocation2 + $0x18] sm:$0xff] %vm68, %v168
      %177 = vst.msk [vmem:[#allocation2 + $0x20] sm:$0xff] %vm68, %v169
      %178 = vst.msk [vmem:[#allocation2 + $0x28] sm:$0xff] %vm68, %v170
      %179 = vst.msk [vmem:[#allocation2 + $0x30] sm:$0xff] %vm68, %v171
      %180 = vst.msk [vmem:[#allocation2 + $0x38] sm:$0xff] %vm68, %v172
    $region17: #{tpu_custom_call.1} parent=1 // pred_fallthru
      _
    %v181 = vld [vmem:[%s1] sm:$0xf]
    %v182 = vld [vmem:[#allocation2] sm:$0xff]
    %v183 = vld [vmem:[#allocation2 + $0x8] sm:$0xff]
    %v184 = vld [vmem:[#allocation2 + $0x10] sm:$0xff]
    %v185 = vld [vmem:[#allocation2 + $0x18] sm:$0xff]
    %v186 = vld [vmem:[#allocation2 + $0x20] sm:$0xff]
    %v187 = vld [vmem:[#allocation2 + $0x28] sm:$0xff]
    %v188 = vld [vmem:[#allocation2 + $0x30] sm:$0xff]
    %v189 = vld [vmem:[#allocation2 + $0x38] sm:$0xff]
    %vm190 = vcmask 261120
    %v192 = vsel %vm190, %v181, 0
    %v195 = vsel %vm190, %v182, 0
    %v198 = vsel %vm190, %v183, 0
    %v201 = vsel %vm190, %v184, 0
    %v204 = vsel %vm190, %v185, 0
    %v207 = vsel %vm190, %v186, 0
    %v210 = vsel %vm190, %v187, 0
    %v213 = vsel %vm190, %v188, 0
    %v216 = vsel %vm190, %v189, 0
    %218 = vmatprep.subr.bf16.mxu0 0
    %219 = vmatpush1.bf16.xpose.msra.mxu0 %v195
    %220 = vmatprep.subr.bf16.mxu0 0
    %221 = vmatpush1.bf16.xpose.msra.mxu0 %v198
    %222 = vmatprep.subr.bf16.mxu0 0
    %223 = vmatpush1.bf16.xpose.msra.mxu0 %v201
    %224 = vmatprep.subr.bf16.mxu0 0
    %225 = vmatpush1.bf16.xpose.msra.mxu0 %v204
    %226 = vmatprep.subr.bf16.mxu0 0
    %227 = vmatpush1.bf16.xpose.msra.mxu0 %v207
    %228 = vmatprep.subr.bf16.mxu0 0
    %229 = vmatpush1.bf16.xpose.msra.mxu0 %v210
    %230 = vmatprep.subr.bf16.mxu0 0
    %231 = vmatpush1.bf16.xpose.msra.mxu0 %v213
    %232 = vmatprep.subr.bf16.mxu0 0
    %233 = vmatpush1.bf16.xpose.msra.mxu0 %v216
    %234 = vmatprep.subr.bf16.mxu0 0
    %235 = vmatpush1.bf16.xpose.msra.mxu0 0
    %236 = vmatprep.subr.bf16.mxu0 0
    %237 = vmatpush1.bf16.xpose.msra.mxu0 0
    %238 = vmatprep.subr.bf16.mxu0 0
    %239 = vmatpush1.bf16.xpose.msra.mxu0 0
    %240 = vmatprep.subr.bf16.mxu0 0
    %241 = vmatpush1.bf16.xpose.msra.mxu0 0
    %242 = vmatprep.subr.bf16.mxu0 0
    %243 = vmatpush1.bf16.xpose.msra.mxu0 0
    %244 = vmatprep.subr.bf16.mxu0 0
    %245 = vmatpush1.bf16.xpose.msra.mxu0 0
    %246 = vmatprep.subr.bf16.mxu0 0
    %247 = vmatpush1.bf16.xpose.msra.mxu0 0
    %248 = vmatprep.subr.bf16.mxu0 0
    %249 = vmatpush1.bf16.xpose.msra.mxu0 0
    %250 = vmatprep.mubr.bf16.mxu0 0
    %251 = vmatmul.mubr.bf16.gmra.mrb[0].mxu0 %v192
    %v252 = vpop.f32.mrb[0].mxu0
    %v253 = vadd.f32 0.0, %v252
    %v254 = vpop.f32.mrb[0].mxu0
    %v255 = vpop.f32.mrb[0].mxu0
    %v256 = vpop.f32.mrb[0].mxu0
    %257 = vdwg.mxu0
    %s258 = smul.u32 0, 128
    %v259 = vlaneseq
    %v260 = vand.u32 %v259, 127
    %v261 = vstv %s258
    %v262 = vadd.s32 %v261, %v260
    %v263 = vld [vmem:[%s0] sm:$0xff]
    %264 = vset.pattern.permute.xlu0 0
    %265 = vperm.xlu0 %264, %v263
    %v266 = vpop.permute.xlu0 %265
    %vm267 = vcmp.eq.s32.totalorder %v262, %v266
    %v268 = vsub.f32 %v253, 10.5
    %v269 = vsel %vm267, %v268, %v253
    %270 = vst [vmem:[#allocation3] sm:$0xff] %v269
    // Predicated region
    $region18: #{tpu_custom_call.1} parent=1 // pred_check
      _
    $region19: #{tpu_custom_call.1} parent=1 // pred_check_branch
      %272 = sbr.rel (0) target = $region21
    $region20: #{tpu_custom_call.1} parent=1 // pred_region
      %s274 = ssub.s32 128, 128
      %275 = vsyncadd [#allocation4], %s274
      %s277 = sshll.u32 [#allocation3], 4
      %s278 = int_to_ptr.vmem [resolvable:$true] %s277
      %280 = dma.vmem_to_hbm [thread:$0]  %s278, 128, %s3, [#allocation4]
    $region21: #{tpu_custom_call.1} parent=1 // pred_fallthru
      _
    // Predicated region
    $region22: #{tpu_custom_call.1} parent=1 // pred_check
      _
    $region23: #{tpu_custom_call.1} parent=1 // pred_check_branch
      %282 = sbr.rel (0) target = $region25
    $region24: #{tpu_custom_call.1} parent=1 // pred_region
      %283 = dma.done [#allocation4], 128
    $region25: #{tpu_custom_call.1} parent=1 // pred_fallthru
      _
    %284 = vsyncpa [#allocation4], 1

</llo_original>
